<compile_context>
chip_gen: v7x
topology: tpu7x:2x2x1
jax: 0.10.0
libtpu: 0.0.40
codegen_flags: <defaults>
</compile_context>

<pallas_src>
import jax
import jax.numpy as jnp
from jax.experimental import pallas as pl
from jax.experimental.pallas import tpu as pltpu


def hbnode_kernel(h_ref, m_ref, wt_ref, b_ref, gates_ref, dh_ref, dm_ref):
    h = h_ref[...]                      # [TB, H]
    m = m_ref[...]                      # [TB, H]

    # scalar gates precomputed in the wrapper (SMEM, no VMEM/vreg broadcast)
    gact = gates_ref[0]                 # sigmoid(gamma)
    sp = gates_ref[1]                   # softplus(corr)

    # dh = Identity(-m)  (full-tile, lane-dense store)
    dh_ref[...] = (-m).astype(dh_ref.dtype)

    # df(t, h) = h @ W.T + b ; W.T was materialized in the wrapper -> plain dot.
    dfh = jnp.dot(h, wt_ref[...], preferred_element_type=jnp.float32)

    # elementwise combine in f32 (v5e-safe), single fused chain
    hf = h.astype(jnp.float32)
    mf = m.astype(jnp.float32)
    dm = dfh + b_ref[...] + (sp * hf - gact * mf)
    dm_ref[...] = dm.astype(dm_ref.dtype)


def _pick_batch_tile(B):
    for tb in (512, 256, 128, 64, 32, 16, 8):
        if B % tb == 0:
            return tb
    return B


def hbnode_forward(t, x, w, b, gamma, corr):
    """t is unused by df (linear layer); kept for forward(t, x) API parity."""
    del t
    B, D = x.shape
    H = D // 2
    assert w.shape == (H, H)

    out_dtype = x.dtype

    # Wrapper-side layout plumbing (free relative to kernel-side relayouts).
    h = x[:, :H]
    m = x[:, H:]
    w_t = jnp.transpose(w)                                   # [H, H], so dot is h @ w_t
    b2d = b.reshape(1, H).astype(jnp.float32)

    # Numerically stable gates, computed once per call (not per tile).
    gates = jnp.stack([
        jax.nn.sigmoid(jnp.asarray(gamma, jnp.float32)),
        jax.nn.softplus(jnp.asarray(corr, jnp.float32)),
    ]).astype(jnp.float32)                                   # shape (2,)

    TB = _pick_batch_tile(B)
    grid = (B // TB,)

    dh, dm = pl.pallas_call(
        hbnode_kernel,
        out_shape=(
            jax.ShapeDtypeStruct((B, H), out_dtype),
            jax.ShapeDtypeStruct((B, H), out_dtype),
        ),
        grid=grid,
        in_specs=[
            pl.BlockSpec((TB, H), lambda i: (i, 0)),         # h (batch-tiled)
            pl.BlockSpec((TB, H), lambda i: (i, 0)),         # m (batch-tiled)
            pl.BlockSpec((H, H), lambda i: (0, 0)),          # W.T (resident)
            pl.BlockSpec((1, H), lambda i: (0, 0)),          # bias
            pl.BlockSpec(memory_space=pltpu.SMEM),           # [sigmoid(gamma), softplus(corr)]
        ],
        out_specs=(
            pl.BlockSpec((TB, H), lambda i: (i, 0)),         # dh
            pl.BlockSpec((TB, H), lambda i: (i, 0)),         # dm
        ),
        compiler_params=pltpu.CompilerParams(
            dimension_semantics=("parallel",),
        ),
    )(h, m, w_t, b2d, gates)

    # TODO(synk): if the consumer can take (dh, dm) separately, skip this concat
    # and keep both halves lane-dense end to end.
    return jnp.concatenate([dh, dm], axis=1)


if __name__ == "__main__":
    key = jax.random.PRNGKey(0)
    k_x, k_w, k_b = jax.random.split(key, 3)

    batch = 8
    hidden = 32                       # h and m are each [batch, hidden]
    D = 2 * hidden

    x = jax.random.normal(k_x, (batch, D), dtype=jnp.float32)
    w = jax.random.normal(k_w, (hidden, hidden), dtype=jnp.float32) * 0.1
    b = jax.random.normal(k_b, (hidden,), dtype=jnp.float32) * 0.1

    gamma_guess = -3.0                # nn.Parameter(gamma_guess)
    corr = -100.0                     # nn.Parameter(corr)
    t = jnp.float32(0.0)

    out = hbnode_forward(t, x, w, b, gamma_guess, corr)
    out = jax.block_until_ready(out)

    # pure-JAX reference check (numerically stable gates)
    h_ref, m_ref = x[:, :hidden], x[:, hidden:]
    dfh = h_ref @ w.T + b
    ref = jnp.concatenate(
        [
            -m_ref,
            dfh
            - jax.nn.sigmoid(jnp.float32(gamma_guess)) * m_ref
            + jax.nn.softplus(jnp.float32(corr)) * h_ref,
        ],
        axis=1,
    )
    assert out.shape == (batch, D)
    assert out.dtype == x.dtype
    assert jnp.allclose(out, ref, atol=1e-5, rtol=1e-5)

    print("KERNEL_OK")
</pallas_src>

<mosaic_0001>
module attributes {stable_mosaic.version = 11 : i64} {
  func.func @hbnode_kernel(%arg0: i32, %arg1: memref<8x32xf32, #tpu.memory_space<vmem>>, %arg2: memref<8x32xf32, #tpu.memory_space<vmem>>, %arg3: memref<32x32xf32, #tpu.memory_space<vmem>>, %arg4: memref<1x32xf32, #tpu.memory_space<vmem>>, %arg5: memref<2xf32, #tpu.memory_space<smem>>, %arg6: memref<8x32xf32, #tpu.memory_space<vmem>>, %arg7: memref<8x32xf32, #tpu.memory_space<vmem>>) attributes {dimension_semantics = [#tpu.dimension_semantics<parallel>], iteration_bounds = array<i64: 1>, scalar_prefetch = 0 : i64, scratch_operands = 0 : i64, tpu.core_type = #tpu.core_type<tc>, window_params = [{transform_indices = @transform_0, window_bounds = array<i64: 8, 32>}, {transform_indices = @transform_1, window_bounds = array<i64: 8, 32>}, {pipeline_mode = #tpu.pipeline_mode<synchronous>, transform_indices = @transform_2, window_bounds = array<i64: 32, 32>}, {pipeline_mode = #tpu.pipeline_mode<synchronous>, transform_indices = @transform_3, window_bounds = array<i64: 1, 32>}, {transform_indices = @transform_4, window_bounds = array<i64: 2>}, {transform_indices = @transform_5, window_bounds = array<i64: 8, 32>}, {transform_indices = @transform_6, window_bounds = array<i64: 8, 32>}]} {
    %c0 = arith.constant 0 : index
    %c0_0 = arith.constant 0 : index
    %0 = vector.load %arg1[%c0, %c0_0] : memref<8x32xf32, #tpu.memory_space<vmem>>, vector<8x32xf32>
    %c0_1 = arith.constant 0 : index
    %c0_2 = arith.constant 0 : index
    %1 = vector.load %arg2[%c0_1, %c0_2] : memref<8x32xf32, #tpu.memory_space<vmem>>, vector<8x32xf32>
    %c0_3 = arith.constant 0 : index
    %2 = memref.load %arg5[%c0_3] : memref<2xf32, #tpu.memory_space<smem>>
    %c1 = arith.constant 1 : index
    %3 = memref.load %arg5[%c1] : memref<2xf32, #tpu.memory_space<smem>>
    %cst = arith.constant 0.000000e+00 : f32
    %4 = vector.broadcast %cst : f32 to vector<8x32xf32>
    %5 = arith.subf %4, %1 : vector<8x32xf32>
    %c0_4 = arith.constant 0 : index
    %c0_5 = arith.constant 0 : index
    %6 = vector.load %arg6[%c0_4, %c0_5] : memref<8x32xf32, #tpu.memory_space<vmem>>, vector<8x32xf32>
    tpu.vector_store %arg6[%c0_4, %c0_5], %5 {strides = array<i32>} : memref<8x32xf32, #tpu.memory_space<vmem>>, vector<8x32xf32>,
    %c0_6 = arith.constant 0 : index
    %c0_7 = arith.constant 0 : index
    %7 = vector.load %arg3[%c0_6, %c0_7] : memref<32x32xf32, #tpu.memory_space<vmem>>, vector<32x32xf32>
    %cst_8 = arith.constant dense<0.000000e+00> : vector<8x32xf32>
    %8 = tpu.matmul %0, %7, %cst_8 {dimension_numbers = #tpu.dot_dimension_numbers<[1], [0], [0], [1], [0, 0, 1, 1], [], []>} : vector<8x32xf32>, vector<32x32xf32>, vector<8x32xf32> -> vector<8x32xf32>
    %c0_9 = arith.constant 0 : index
    %c0_10 = arith.constant 0 : index
    %9 = vector.load %arg4[%c0_9, %c0_10] : memref<1x32xf32, #tpu.memory_space<vmem>>, vector<1x32xf32>
    %10 = vector.broadcast %9 : vector<1x32xf32> to vector<8x32xf32>
    %11 = arith.addf %8, %10 : vector<8x32xf32>
    %12 = vector.broadcast %3 : f32 to vector<8x32xf32>
    %13 = arith.mulf %12, %0 : vector<8x32xf32>
    %14 = vector.broadcast %2 : f32 to vector<8x32xf32>
    %15 = arith.mulf %14, %1 : vector<8x32xf32>
    %16 = arith.subf %13, %15 : vector<8x32xf32>
    %17 = arith.addf %11, %16 : vector<8x32xf32>
    %c0_11 = arith.constant 0 : index
    %c0_12 = arith.constant 0 : index
    %18 = vector.load %arg7[%c0_11, %c0_12] : memref<8x32xf32, #tpu.memory_space<vmem>>, vector<8x32xf32>
    tpu.vector_store %arg7[%c0_11, %c0_12], %17 {strides = array<i32>} : memref<8x32xf32, #tpu.memory_space<vmem>>, vector<8x32xf32>,
    return
  }
  func.func @transform_0(%arg0: i32) -> (i32, i32) {
    %c0_i32 = arith.constant 0 : i32
    %c0_i32_0 = arith.constant 0 : i32
    return %arg0, %c0_i32 : i32, i32
  }
  func.func @transform_1(%arg0: i32) -> (i32, i32) {
    %c0_i32 = arith.constant 0 : i32
    %c0_i32_0 = arith.constant 0 : i32
    return %arg0, %c0_i32 : i32, i32
  }
  func.func @transform_2(%arg0: i32) -> (i32, i32) {
    %c0_i32 = arith.constant 0 : i32
    %c0_i32_0 = arith.constant 0 : i32
    %c0_i32_1 = arith.constant 0 : i32
    return %c0_i32, %c0_i32_0 : i32, i32
  }
  func.func @transform_3(%arg0: i32) -> (i32, i32) {
    %c0_i32 = arith.constant 0 : i32
    %c0_i32_0 = arith.constant 0 : i32
    %c0_i32_1 = arith.constant 0 : i32
    return %c0_i32, %c0_i32_0 : i32, i32
  }
  func.func @transform_4(%arg0: i32) -> i32 {
    %c0_i32 = arith.constant 0 : i32
    %c0_i32_0 = arith.constant 0 : i32
    return %c0_i32 : i32
  }
  func.func @transform_5(%arg0: i32) -> (i32, i32) {
    %c0_i32 = arith.constant 0 : i32
    %c0_i32_0 = arith.constant 0 : i32
    return %arg0, %c0_i32 : i32, i32
  }
  func.func @transform_6(%arg0: i32) -> (i32, i32) {
    %c0_i32 = arith.constant 0 : i32
    %c0_i32_0 = arith.constant 0 : i32
    return %arg0, %c0_i32 : i32, i32
  }
}

</mosaic_0001>

<llo_original>
// kernel: tpu_custom_call.1
$region0: #{tpu_custom_call.1}
  #allocation0 [shape = 'u32[]', space=smem, size = 0x4, offset = 0x4, fixed_abs, tag = 'smem constant byte address 0x4 - core index']
  #allocation1 [shape = 'u32[144,128]{1,0:T(1,128)}', space=vmem, size = 0x12000, scoped, tag = 'internal scratch']
  %s0 = inlined_call_operand.hbm [shape: f32[8,32], index: 0, kind: input, shape index: {}]
  %s1 = inlined_call_operand.hbm [shape: f32[8,32], index: 1, kind: input, shape index: {}]
  %s2 = inlined_call_operand.hbm [shape: f32[32,32], index: 2, kind: input, shape index: {}]
  %s3 = inlined_call_operand.vmem [shape: f32[1,32], index: 3, kind: input, shape index: {}]
  %s4 = inlined_call_operand.vmem [shape: f32[2], index: 4, kind: input, shape index: {}]
  %s5 = inlined_call_operand.hbm [shape: f32[8,32], index: 5, kind: output, shape index: {0}]
  %s6 = inlined_call_operand.hbm [shape: f32[8,32], index: 6, kind: output, shape index: {1}]
  %7 = xla_tuple %s5, %s6
  %s8 = sld [smem:[#allocation0]]
  $region54: #{tpu_custom_call.1} parent=0
    _
  %s10 = ssub.s32 1, %s8
  %s11 = scalar_select 0, %s10, %s8
  $region1: #{tpu_custom_call.1} parent=0
    #allocation2 [shape = 'u8[4096]{0}', space=vmem, size = 0x1000, scoped, tag = 'input window, operand 0, single buffered']
    #allocation3 [shape = 's32[1]{0}', space=sflag, size = 0x4, scoped, tag = 'scoped memory for tpu_custom_call.1']
    #allocation4 [shape = 's32[1]{0}', space=sflag, size = 0x4, scoped, tag = 'scoped memory for tpu_custom_call.1']
    #allocation5 [shape = 's32[1]{0}', space=sflag, size = 0x4, scoped, tag = 'scoped memory for tpu_custom_call.1']
    #allocation6 [shape = 'u8[4096]{0}', space=vmem, size = 0x1000, scoped, tag = 'input window, operand 1, single buffered']
    #allocation7 [shape = 's32[1]{0}', space=sflag, size = 0x4, scoped, tag = 'scoped memory for tpu_custom_call.1']
    #allocation8 [shape = 'u8[16384]{0}', space=vmem, size = 0x4000, scoped, tag = 'input window, operand 2, single buffered']
    #allocation9 [shape = 'u8[512]{0}', space=smem, size = 0x200, scoped, tag = 'input window, operand 4, single buffered']
    #allocation10 [shape = 'u8[4096]{0}', space=vmem, size = 0x1000, scoped, tag = 'output window, operand 0, single buffered']
    #allocation11 [shape = 'u8[4096]{0}', space=vmem, size = 0x1000, scoped, tag = 'output window, operand 1, single buffered']
    #allocation12 [shape = 's32[1]{0}', space=sflag, size = 0x4, scoped, tag = 'scoped memory for tpu_custom_call.1']
    %12 = vsyncpa [#allocation3], 0
    %13 = vsyncpa [#allocation7], 0
    %14 = vsyncpa [#allocation5], 0
    %15 = vsyncpa [#allocation4], 0
    %16 = vsyncpa [#allocation12], 0
    // Predicated region
    $region2: #{tpu_custom_call.1} parent=1 // pred_check
      _
    $region3: #{tpu_custom_call.1} parent=1 // pred_check_branch
      %18 = sbr.rel (0) target = $region5
    $region4: #{tpu_custom_call.1} parent=1 // pred_region
      %s20 = ssub.s32 128, 128
      %21 = vsyncadd [#allocation3], %s20
      %s23 = sshll.u32 [#allocation2], 4
      %s24 = int_to_ptr.vmem [resolvable:$true] %s23
      %26 = dma.hbm_to_vmem [thread:$0]  %s0, 128, %s24, [#allocation3]
    $region5: #{tpu_custom_call.1} parent=1 // pred_fallthru
      _
    // Predicated region
    $region6: #{tpu_custom_call.1} parent=1 // pred_check
      _
    $region7: #{tpu_custom_call.1} parent=1 // pred_check_branch
      %28 = sbr.rel (0) target = $region9
    $region8: #{tpu_custom_call.1} parent=1 // pred_region
      %s30 = ssub.s32 128, 128
      %31 = vsyncadd [#allocation7], %s30
      %s33 = sshll.u32 [#allocation6], 4
      %s34 = int_to_ptr.vmem [resolvable:$true] %s33
      %36 = dma.hbm_to_vmem [thread:$0]  %s1, 128, %s34, [#allocation7]
    $region9: #{tpu_custom_call.1} parent=1 // pred_fallthru
      _
    // Predicated region
    $region10: #{tpu_custom_call.1} parent=1 // pred_check
      _
    $region11: #{tpu_custom_call.1} parent=1 // pred_check_branch
      %38 = sbr.rel (0) target = $region13
    $region12: #{tpu_custom_call.1} parent=1 // pred_region
      %s40 = ssub.s32 512, 512
      %41 = vsyncadd [#allocation7], %s40
      %s42 = sshll.u32 [#allocation8], 4
      %s43 = int_to_ptr.vmem [resolvable:$true] %s42
      %48 = dma.hbm_to_vmem [thread:$0]  %s2, 512, %s43, [#allocation7], 128, 128, 8
    $region13: #{tpu_custom_call.1} parent=1 // pred_fallthru
      _
    // Predicated region
    $region14: #{tpu_custom_call.1} parent=1 // pred_check
      _
    $region15: #{tpu_custom_call.1} parent=1 // pred_check_branch
      %50 = sbr.rel (0) target = $region17
    $region16: #{tpu_custom_call.1} parent=1 // pred_region
      _
    $region17: #{tpu_custom_call.1} parent=1 // pred_fallthru
      _
    // Predicated region
    $region18: #{tpu_custom_call.1} parent=1 // pred_check
      _
    $region19: #{tpu_custom_call.1} parent=1 // pred_check_branch
      %52 = sbr.rel (0) target = $region21
    $region20: #{tpu_custom_call.1} parent=1 // pred_region
      %s54 = ssub.s32 16, 16
      %55 = vsyncadd [#allocation5], %s54
      %s57 = sshll.u32 %s4, 4
      %s58 = int_to_ptr.vmem [resolvable:$true] %s57
      %60 = dma.vmem_to_smem %s58, 16, [#allocation9], [#allocation5]
    $region21: #{tpu_custom_call.1} parent=1 // pred_fallthru
      _
    // Predicated region
    $region22: #{tpu_custom_call.1} parent=1 // pred_check
      _
    $region23: #{tpu_custom_call.1} parent=1 // pred_check_branch
      %62 = sbr.rel (0) target = $region25
    $region24: #{tpu_custom_call.1} parent=1 // pred_region
      %63 = dma.done [#allocation3], 128
    $region25: #{tpu_custom_call.1} parent=1 // pred_fallthru
      _
    // Predicated region
    $region26: #{tpu_custom_call.1} parent=1 // pred_check
      _
    $region27: #{tpu_custom_call.1} parent=1 // pred_check_branch
      %65 = sbr.rel (0) target = $region29
    $region28: #{tpu_custom_call.1} parent=1 // pred_region
      %66 = dma.done [#allocation7], 128
    $region29: #{tpu_custom_call.1} parent=1 // pred_fallthru
      _
    // Predicated region
    $region30: #{tpu_custom_call.1} parent=1 // pred_check
      _
    $region31: #{tpu_custom_call.1} parent=1 // pred_check_branch
      %68 = sbr.rel (0) target = $region33
    $region32: #{tpu_custom_call.1} parent=1 // pred_region
      %69 = dma.done [#allocation7], 512
    $region33: #{tpu_custom_call.1} parent=1 // pred_fallthru
      _
    // Predicated region
    $region34: #{tpu_custom_call.1} parent=1 // pred_check
      _
    $region35: #{tpu_custom_call.1} parent=1 // pred_check_branch
      %71 = sbr.rel (0) target = $region37
    $region36: #{tpu_custom_call.1} parent=1 // pred_region
      %72 = dma.done [#allocation5], 16
    $region37: #{tpu_custom_call.1} parent=1 // pred_fallthru
      _
    %73 = sfence
    %v74 = vld [vmem:[#allocation2] sm:$0xff]
    %v75 = vld [vmem:[#allocation6] sm:$0xff]
    %s76 = sld [smem:[#allocation9]]
    %s77 = sld [smem:[#allocation9 + $0x1]]
    %v78 = vsub.f32 0.0, %v75
    %vm79 = vcmask 261120
    %80 = vst.msk [vmem:[#allocation10] sm:$0xff] %vm79, %v78
    %v81 = vld [vmem:[#allocation8] sm:$0xff]
    %v82 = vld [vmem:[#allocation8 + $0x8] sm:$0xff]
    %v83 = vld [vmem:[#allocation8 + $0x10] sm:$0xff]
    %v84 = vld [vmem:[#allocation8 + $0x18] sm:$0xff]
    %v85 = vld [vmem:[%s3] sm:$0x1]
    %v87 = vlaneseq
    %v88 = vshrl.u32 %v87, 7
    %v89 = vsub.s32 0, %v88
    %v90 = vrot.slane %v85, %v89
    %v93 = vsel %vm79, %v74, 0
    %95 = vmatprep.subr.mxu0 0.0
    %96 = vmatpush1.msra.mxu0 %v81
    %97 = vmatprep.subr.mxu0 0.0
    %98 = vmatpush1.msra.mxu0 %v82
    %99 = vmatprep.subr.mxu0 0.0
    %100 = vmatpush1.msra.mxu0 %v83
    %101 = vmatprep.subr.mxu0 0.0
    %102 = vmatpush1.msra.mxu0 %v84
    %103 = vmatprep.subr.mxu0 0.0
    %104 = vmatpush1.msra.mxu0 0.0
    %105 = vmatprep.subr.mxu0 0.0
    %106 = vmatpush1.msra.mxu0 0.0
    %107 = vmatprep.subr.mxu0 0.0
    %108 = vmatpush1.msra.mxu0 0.0
    %109 = vmatprep.subr.mxu0 0.0
    %110 = vmatpush1.msra.mxu0 0.0
    %111 = vmatprep.subr.mxu0 0.0
    %112 = vmatpush1.msra.mxu0 0.0
    %113 = vmatprep.subr.mxu0 0.0
    %114 = vmatpush1.msra.mxu0 0.0
    %115 = vmatprep.subr.mxu0 0.0
    %116 = vmatpush1.msra.mxu0 0.0
    %117 = vmatprep.subr.mxu0 0.0
    %118 = vmatpush1.msra.mxu0 0.0
    %119 = vmatprep.subr.mxu0 0.0
    %120 = vmatpush1.msra.mxu0 0.0
    %121 = vmatprep.subr.mxu0 0.0
    %122 = vmatpush1.msra.mxu0 0.0
    %123 = vmatprep.subr.mxu0 0.0
    %124 = vmatpush1.msra.mxu0 0.0
    %125 = vmatprep.subr.mxu0 0.0
    %126 = vmatpush1.msra.mxu0 0.0
    %127 = vmatprep.subr.mxu0 0.0
    %128 = vmatpush1.msra.mxu0 0.0
    %129 = vmatprep.subr.mxu0 0.0
    %130 = vmatpush1.msra.mxu0 0.0
    %131 = vmatprep.subr.mxu0 0.0
    %132 = vmatpush1.msra.mxu0 0.0
    %133 = vmatprep.subr.mxu0 0.0
    %134 = vmatpush1.msra.mxu0 0.0
    %135 = vmatprep.subr.mxu0 0.0
    %136 = vmatpush1.msra.mxu0 0.0
    %137 = vmatprep.subr.mxu0 0.0
    %138 = vmatpush1.msra.mxu0 0.0
    %139 = vmatprep.subr.mxu0 0.0
    %140 = vmatpush1.msra.mxu0 0.0
    %141 = vmatprep.subr.mxu0 0.0
    %142 = vmatpush1.msra.mxu0 0.0
    %143 = vmatprep.subr.mxu0 0.0
    %144 = vmatpush1.msra.mxu0 0.0
    %145 = vmatprep.subr.mxu0 0.0
    %146 = vmatpush1.msra.mxu0 0.0
    %147 = vmatprep.subr.mxu0 0.0
    %148 = vmatpush1.msra.mxu0 0.0
    %149 = vmatprep.subr.mxu0 0.0
    %150 = vmatpush1.msra.mxu0 0.0
    %151 = vmatprep.subr.mxu0 0.0
    %152 = vmatpush1.msra.mxu0 0.0
    %153 = vmatprep.subr.mxu0 0.0
    %154 = vmatpush1.msra.mxu0 0.0
    %155 = vmatprep.subr.mxu0 0.0
    %156 = vmatpush1.msra.mxu0 0.0
    %157 = vmatprep.subr.mxu0 0.0
    %158 = vmatpush1.msra.mxu0 0.0
    %159 = vmatprep.mubr.f32.mxu0 0.0
    %160 = vmatmul.mubr.f32.gmra.mrb[0].mxu0 %v93
    %v161 = vpop.f32.mrb[0].mxu0
    %v162 = vadd.f32 %v90, %v161
    %v163 = vpop.f32.mrb[0].mxu0
    %164 = vdwg.mxu0
    %v165 = vstv %s77
    %v166 = vmul.f32 %v165, %v74
    %v167 = vstv %s76
    %v168 = vmul.f32 %v167, %v75
    %v169 = vsub.f32 %v166, %v168
    %v170 = vadd.f32 %v162, %v169
    %171 = vst.msk [vmem:[#allocation11] sm:$0xff] %vm79, %v170
    // Predicated region
    $region38: #{tpu_custom_call.1} parent=1 // pred_check
      _
    $region39: #{tpu_custom_call.1} parent=1 // pred_check_branch
      %173 = sbr.rel (0) target = $region41
    $region40: #{tpu_custom_call.1} parent=1 // pred_region
      %s175 = ssub.s32 128, 128
      %176 = vsyncadd [#allocation4], %s175
      %s178 = sshll.u32 [#allocation10], 4
      %s179 = int_to_ptr.vmem [resolvable:$true] %s178
      %181 = dma.vmem_to_hbm [thread:$0]  %s179, 128, %s5, [#allocation4]
    $region41: #{tpu_custom_call.1} parent=1 // pred_fallthru
      _
    // Predicated region
    $region42: #{tpu_custom_call.1} parent=1 // pred_check
      _
    $region43: #{tpu_custom_call.1} parent=1 // pred_check_branch
      %183 = sbr.rel (0) target = $region45
    $region44: #{tpu_custom_call.1} parent=1 // pred_region
      %s185 = ssub.s32 128, 128
      %186 = vsyncadd [#allocation12], %s185
      %s188 = sshll.u32 [#allocation11], 4
      %s189 = int_to_ptr.vmem [resolvable:$true] %s188
      %191 = dma.vmem_to_hbm [thread:$0]  %s189, 128, %s6, [#allocation12]
    $region45: #{tpu_custom_call.1} parent=1 // pred_fallthru
      _
    // Predicated region
    $region46: #{tpu_custom_call.1} parent=1 // pred_check
      _
    $region47: #{tpu_custom_call.1} parent=1 // pred_check_branch
      %193 = sbr.rel (0) target = $region49
    $region48: #{tpu_custom_call.1} parent=1 // pred_region
      %194 = dma.done [#allocation4], 128
    $region49: #{tpu_custom_call.1} parent=1 // pred_fallthru
      _
    // Predicated region
    $region50: #{tpu_custom_call.1} parent=1 // pred_check
      _
    $region51: #{tpu_custom_call.1} parent=1 // pred_check_branch
      %196 = sbr.rel (0) target = $region53
    $region52: #{tpu_custom_call.1} parent=1 // pred_region
      %197 = dma.done [#allocation12], 128
    $region53: #{tpu_custom_call.1} parent=1 // pred_fallthru
      _
    %198 = vsyncpa [#allocation3], 1
    %199 = vsyncpa [#allocation7], 1
    %200 = vsyncpa [#allocation4], 1
    %201 = vsyncpa [#allocation12], 1
    %202 = vsyncpa [#allocation5], 1

</llo_original>
